<compile_context>
chip_gen: v7x
topology: tpu7x:2x2x1
jax: 0.10.0
libtpu: 0.0.40
codegen_flags: <defaults>
</compile_context>

<pallas_src>
import functools

import jax
import jax.numpy as jnp
from jax.experimental import pallas as pl
from jax.experimental.pallas import tpu as pltpu


def _round_up(a, m):
    return (a + m - 1) // m * m


def _padded_step_bytes(tb, n, k, x_itemsize):
    """Lane/sublane-padded, double-buffered VMEM bytes for one grid step."""
    x_tile = _round_up(tb * n, 8) * _round_up(n, 128) * x_itemsize      # (tb*N, N)
    o_tile = _round_up(tb, 8) * _round_up(n * k, 128) * 4               # (tb, N*K)
    w_tile = _round_up(n, 8) * _round_up(k, 128) * x_itemsize           # (N, K)
    b_tile = _round_up(n, 8) * _round_up(k, 128) * 4                    # (N, K)
    return 2 * (x_tile + o_tile + w_tile + b_tile)                      # double-buffered


def _vmem_budget_and_limit():
    """Per-step padded-footprint budget + scoped-VMEM limit for this chip."""
    try:
        cap = int(getattr(pltpu.get_tpu_info(), "vmem_capacity_bytes", 64 << 20))
    except Exception:  # conservative fallback (v7x-sized)
        cap = 64 << 20
    budget = cap // 4                                   # headroom for compiler scratch
    limit = max(16 << 20, min(cap - (8 << 20), max(32 << 20, 2 * budget)))
    return budget, limit


def _choose_tb(B, n, k, x_itemsize, budget):
    """Batch-slabs per grid step.

    tb is either B (single step — best on single-TC chips for this
    mem-bound op) or a multiple of 8 (keeps both the x block's tm=tb*N and
    the dense-output block's tb rows legal under the (8,128) rule) sized to
    the *padded* VMEM budget, preferring an even number of grid steps so
    v7x's two TensorCores get balanced work.
    """
    if _padded_step_bytes(B, n, k, x_itemsize) <= budget:
        return B
    tb = 8
    while tb + 8 <= B and _padded_step_bytes(tb + 8, n, k, x_itemsize) <= budget:
        tb += 8
    nsteps = -(-B // tb)
    if nsteps > 1 and nsteps % 2 == 1:
        tb_even = _round_up(-(-B // (nsteps + 1)), 8)
        if 8 <= tb_even <= tb:
            tb = tb_even
    return min(tb, B)


def _time2vec_kernel(x_ref, w_ref, bias_ref, out_ref, *, tb, n, k):
    # x_ref: (tb*N, N)  w_ref: (N, K)  bias_ref: (N, K)  out_ref: (tb, N*K)
    # Single fused MXU matmul, f32 accumulation.
    y = jnp.dot(x_ref[...], w_ref[...], preferred_element_type=jnp.float32)
    # Bias broadcast: row r of any slab uses bias row (r mod N).  Reshape to
    # (tb, N, K) keeps the last dim unchanged, so it is cheap.
    y = y.reshape(tb, n, k) + bias_ref[...]
    # sin() on the first K-1 lanes; the last (linear) lane keeps the pre-sin value.
    lane = jax.lax.broadcasted_iota(jnp.int32, y.shape, dimension=2)
    y = jnp.where(lane < (k - 1), jnp.sin(y), y)
    # Lane-dense store: one wide unmasked write of (tb, N*K).
    out_ref[...] = y.reshape(tb, n * k).astype(out_ref.dtype)


def time2vec(x, w, b, w0, b0, *, use_bf16=False):
    """Time2Vec forward.

    x: (B, N, N) with N == input_size (reference bias-broadcast constraint).
    Returns (B, N, output_size).
    """
    B, N, Nf = x.shape
    assert N == Nf == w.shape[0] == w0.shape[0] == b.shape[0] == b0.shape[0]
    K = w.shape[1] + 1
    NK = N * K

    # Fuse periodic + linear branches into one weight / one bias.
    w_fused = jnp.concatenate([w, w0], axis=1)                        # (N, K)
    bias_fused = jnp.concatenate([b, b0], axis=1).astype(jnp.float32)  # (N, K)

    x2d = x.reshape(B * N, N)
    if use_bf16:
        # Halves the dominant HBM read of this bandwidth-bound kernel.
        x2d = x2d.astype(jnp.bfloat16)
        w_fused = w_fused.astype(jnp.bfloat16)

    budget, vmem_limit = _vmem_budget_and_limit()
    tb = _choose_tb(B, N, K, x2d.dtype.itemsize, budget)
    tm = tb * N
    grid = (pl.cdiv(B, tb),)

    cost = pl.CostEstimate(
        flops=2 * B * N * N * K,
        transcendentals=B * N * K,
        bytes_accessed=(x2d.dtype.itemsize * (B * N * N + N * K)
                        + 4 * (N * K + B * N * K)),
    )

    out2d = pl.pallas_call(
        functools.partial(_time2vec_kernel, tb=tb, n=N, k=K),
        out_shape=jax.ShapeDtypeStruct((B, NK), x.dtype),
        grid=grid,
        in_specs=[
            pl.BlockSpec((tm, N), lambda i: (i, 0)),   # x row tile
            pl.BlockSpec((N, K), lambda i: (0, 0)),    # fused weights (resident)
            pl.BlockSpec((N, K), lambda i: (0, 0)),    # fused bias (resident, small)
        ],
        out_specs=pl.BlockSpec((tb, NK), lambda i: (i, 0)),  # lane-dense output
        compiler_params=pltpu.CompilerParams(
            dimension_semantics=("parallel",),
            vmem_limit_bytes=vmem_limit,
        ),
        cost_estimate=cost,
    )(x2d, w_fused, bias_fused)

    # Free metadata reshape back to (B, N, K).
    return out2d.reshape(B, N, K)


if __name__ == "__main__":
    B = 2
    input_size = 16     # N (both seq dim and feature dim, per broadcast rule)
    output_size = 8     # K

    key = jax.random.PRNGKey(0)
    kx, kw, kb, kw0, kb0 = jax.random.split(key, 5)

    x = jax.random.normal(kx, (B, input_size, input_size), dtype=jnp.float32)
    w = jax.random.normal(kw, (input_size, output_size - 1), dtype=jnp.float32)
    b = jax.random.normal(kb, (input_size, output_size - 1), dtype=jnp.float32)
    w0 = jax.random.normal(kw0, (input_size, 1), dtype=jnp.float32)
    b0 = jax.random.normal(kb0, (input_size, 1), dtype=jnp.float32)

    out = jax.block_until_ready(time2vec(x, w, b, w0, b0))

    # Pure-JAX reference check (same semantics as the PyTorch forward).
    ref = jnp.concatenate(
        [jnp.sin(jnp.matmul(x, w) + b), jnp.matmul(x, w0) + b0], axis=-1
    )
    assert out.shape == (B, input_size, output_size)
    assert jnp.allclose(out, ref, atol=1e-5, rtol=1e-5)

    print("KERNEL_OK")
</pallas_src>

<mosaic_0001>
module attributes {stable_mosaic.version = 11 : i64} {
  func.func @_time2vec_kernel(%arg0: i32, %arg1: memref<32x16xf32, #tpu.memory_space<vmem>>, %arg2: memref<16x8xf32, #tpu.memory_space<vmem>>, %arg3: memref<16x8xf32, #tpu.memory_space<vmem>>, %arg4: memref<2x128xf32, #tpu.memory_space<vmem>>) attributes {dimension_semantics = [#tpu.dimension_semantics<parallel>], iteration_bounds = array<i64: 1>, scalar_prefetch = 0 : i64, scratch_operands = 0 : i64, tpu.core_type = #tpu.core_type<tc>, window_params = [{transform_indices = @transform_0, window_bounds = array<i64: 32, 16>}, {pipeline_mode = #tpu.pipeline_mode<synchronous>, transform_indices = @transform_1, window_bounds = array<i64: 16, 8>}, {pipeline_mode = #tpu.pipeline_mode<synchronous>, transform_indices = @transform_2, window_bounds = array<i64: 16, 8>}, {transform_indices = @transform_3, window_bounds = array<i64: 2, 128>}]} {
    %c0 = arith.constant 0 : index
    %c0_0 = arith.constant 0 : index
    %0 = vector.load %arg1[%c0, %c0_0] : memref<32x16xf32, #tpu.memory_space<vmem>>, vector<32x16xf32>
    %c0_1 = arith.constant 0 : index
    %c0_2 = arith.constant 0 : index
    %1 = vector.load %arg2[%c0_1, %c0_2] : memref<16x8xf32, #tpu.memory_space<vmem>>, vector<16x8xf32>
    %cst = arith.constant dense<0.000000e+00> : vector<32x8xf32>
    %2 = tpu.matmul %0, %1, %cst {dimension_numbers = #tpu.dot_dimension_numbers<[1], [0], [0], [1], [0, 0, 1, 1], [], []>} : vector<32x16xf32>, vector<16x8xf32>, vector<32x8xf32> -> vector<32x8xf32>
    %3 = vector.shape_cast %2 : vector<32x8xf32> to vector<2x16x8xf32>
    %c0_3 = arith.constant 0 : index
    %c0_4 = arith.constant 0 : index
    %4 = vector.load %arg3[%c0_3, %c0_4] : memref<16x8xf32, #tpu.memory_space<vmem>>, vector<16x8xf32>
    %5 = vector.shape_cast %4 : vector<16x8xf32> to vector<1x16x8xf32>
    %6 = vector.broadcast %5 : vector<1x16x8xf32> to vector<2x16x8xf32>
    %7 = arith.addf %3, %6 : vector<2x16x8xf32>
    %8 = tpu.iota {dimensions = array<i32: 2>} : vector<2x16x8xi32>
    %c7_i32 = arith.constant 7 : i32
    %9 = vector.broadcast %c7_i32 : i32 to vector<2x16x8xi32>
    %10 = arith.cmpi slt, %8, %9 : vector<2x16x8xi32>
    %11 = math.sin %7 : vector<2x16x8xf32>
    %12 = arith.select %10, %11, %7 : vector<2x16x8xi1>, vector<2x16x8xf32>
    %13 = vector.shape_cast %12 : vector<2x16x8xf32> to vector<2x128xf32>
    %c0_5 = arith.constant 0 : index
    %c0_6 = arith.constant 0 : index
    %14 = vector.load %arg4[%c0_5, %c0_6] : memref<2x128xf32, #tpu.memory_space<vmem>>, vector<2x128xf32>
    tpu.vector_store %arg4[%c0_5, %c0_6], %13 {strides = array<i32>} : memref<2x128xf32, #tpu.memory_space<vmem>>, vector<2x128xf32>,
    return
  }
  func.func @transform_0(%arg0: i32) -> (i32, i32) {
    %c0_i32 = arith.constant 0 : i32
    %c0_i32_0 = arith.constant 0 : i32
    return %arg0, %c0_i32 : i32, i32
  }
  func.func @transform_1(%arg0: i32) -> (i32, i32) {
    %c0_i32 = arith.constant 0 : i32
    %c0_i32_0 = arith.constant 0 : i32
    %c0_i32_1 = arith.constant 0 : i32
    return %c0_i32, %c0_i32_0 : i32, i32
  }
  func.func @transform_2(%arg0: i32) -> (i32, i32) {
    %c0_i32 = arith.constant 0 : i32
    %c0_i32_0 = arith.constant 0 : i32
    %c0_i32_1 = arith.constant 0 : i32
    return %c0_i32, %c0_i32_0 : i32, i32
  }
  func.func @transform_3(%arg0: i32) -> (i32, i32) {
    %c0_i32 = arith.constant 0 : i32
    %c0_i32_0 = arith.constant 0 : i32
    return %arg0, %c0_i32 : i32, i32
  }
}

</mosaic_0001>

<llo_original>
// kernel: tpu_custom_call.1
$region0: #{tpu_custom_call.1}
  #allocation0 [shape = 'u32[]', space=smem, size = 0x4, offset = 0x4, fixed_abs, tag = 'smem constant byte address 0x4 - core index']
  #allocation1 [shape = 'u32[144,128]{1,0:T(1,128)}', space=vmem, size = 0x12000, scoped, tag = 'internal scratch']
  %s0 = inlined_call_operand.vmem [shape: f32[32,16], index: 0, kind: input, shape index: {}]
  %s1 = inlined_call_operand.vmem [shape: f32[16,8], index: 1, kind: input, shape index: {}]
  %s2 = inlined_call_operand.vmem [shape: f32[16,8], index: 2, kind: input, shape index: {}]
  %s3 = inlined_call_operand.hbm [shape: f32[2,128], index: 3, kind: output, shape index: {}]
  %s4 = sld [smem:[#allocation0]]
  $region22: #{tpu_custom_call.1} parent=0
    _
  %s6 = ssub.s32 1, %s4
  %s7 = scalar_select 0, %s6, %s4
  $region1: #{tpu_custom_call.1} parent=0
    #allocation2 [shape = 'u8[1024]{0}', space=vmem, size = 0x400, scoped, tag = 'output window, operand 0, single buffered']
    #allocation3 [shape = 's32[1]{0}', space=sflag, size = 0x4, scoped, tag = 'scoped memory for tpu_custom_call.1']
    %8 = vsyncpa [#allocation3], 0
    // Predicated region
    $region2: #{tpu_custom_call.1} parent=1 // pred_check
      _
    $region3: #{tpu_custom_call.1} parent=1 // pred_check_branch
      %10 = sbr.rel (0) target = $region5
    $region4: #{tpu_custom_call.1} parent=1 // pred_region
      _
    $region5: #{tpu_custom_call.1} parent=1 // pred_fallthru
      _
    // Predicated region
    $region6: #{tpu_custom_call.1} parent=1 // pred_check
      _
    $region7: #{tpu_custom_call.1} parent=1 // pred_check_branch
      %12 = sbr.rel (0) target = $region9
    $region8: #{tpu_custom_call.1} parent=1 // pred_region
      _
    $region9: #{tpu_custom_call.1} parent=1 // pred_fallthru
      _
    // Predicated region
    $region10: #{tpu_custom_call.1} parent=1 // pred_check
      _
    $region11: #{tpu_custom_call.1} parent=1 // pred_check_branch
      %14 = sbr.rel (0) target = $region13
    $region12: #{tpu_custom_call.1} parent=1 // pred_region
      _
    $region13: #{tpu_custom_call.1} parent=1 // pred_fallthru
      _
    %v15 = vld [vmem:[%s0] sm:$0xff]
    %v16 = vld [vmem:[%s0 + $0x8] sm:$0xff]
    %v17 = vld [vmem:[%s0 + $0x10] sm:$0xff]
    %v18 = vld [vmem:[%s0 + $0x18] sm:$0xff]
    %v19 = vld [vmem:[%s1] sm:$0xff]
    %v20 = vld [vmem:[%s1 + $0x8] sm:$0xff]
    %vm21 = vcmask 130048
    %v23 = vsel %vm21, %v15, 0
    %v26 = vsel %vm21, %v16, 0
    %v29 = vsel %vm21, %v17, 0
    %v32 = vsel %vm21, %v18, 0
    %34 = vmatprep.subr.mxu0 0.0
    %35 = vmatpush1.msra.mxu0 %v19
    %36 = vmatprep.subr.mxu0 0.0
    %37 = vmatpush1.msra.mxu0 %v20
    %38 = vmatprep.subr.mxu0 0.0
    %39 = vmatpush1.msra.mxu0 0.0
    %40 = vmatprep.subr.mxu0 0.0
    %41 = vmatpush1.msra.mxu0 0.0
    %42 = vmatprep.subr.mxu0 0.0
    %43 = vmatpush1.msra.mxu0 0.0
    %44 = vmatprep.subr.mxu0 0.0
    %45 = vmatpush1.msra.mxu0 0.0
    %46 = vmatprep.subr.mxu0 0.0
    %47 = vmatpush1.msra.mxu0 0.0
    %48 = vmatprep.subr.mxu0 0.0
    %49 = vmatpush1.msra.mxu0 0.0
    %50 = vmatprep.subr.mxu0 0.0
    %51 = vmatpush1.msra.mxu0 0.0
    %52 = vmatprep.subr.mxu0 0.0
    %53 = vmatpush1.msra.mxu0 0.0
    %54 = vmatprep.subr.mxu0 0.0
    %55 = vmatpush1.msra.mxu0 0.0
    %56 = vmatprep.subr.mxu0 0.0
    %57 = vmatpush1.msra.mxu0 0.0
    %58 = vmatprep.subr.mxu0 0.0
    %59 = vmatpush1.msra.mxu0 0.0
    %60 = vmatprep.subr.mxu0 0.0
    %61 = vmatpush1.msra.mxu0 0.0
    %62 = vmatprep.subr.mxu0 0.0
    %63 = vmatpush1.msra.mxu0 0.0
    %64 = vmatprep.subr.mxu0 0.0
    %65 = vmatpush1.msra.mxu0 0.0
    %66 = vmatprep.subr.mxu0 0.0
    %67 = vmatpush1.msra.mxu0 0.0
    %68 = vmatprep.subr.mxu0 0.0
    %69 = vmatpush1.msra.mxu0 0.0
    %70 = vmatprep.subr.mxu0 0.0
    %71 = vmatpush1.msra.mxu0 0.0
    %72 = vmatprep.subr.mxu0 0.0
    %73 = vmatpush1.msra.mxu0 0.0
    %74 = vmatprep.subr.mxu0 0.0
    %75 = vmatpush1.msra.mxu0 0.0
    %76 = vmatprep.subr.mxu0 0.0
    %77 = vmatpush1.msra.mxu0 0.0
    %78 = vmatprep.subr.mxu0 0.0
    %79 = vmatpush1.msra.mxu0 0.0
    %80 = vmatprep.subr.mxu0 0.0
    %81 = vmatpush1.msra.mxu0 0.0
    %82 = vmatprep.subr.mxu0 0.0
    %83 = vmatpush1.msra.mxu0 0.0
    %84 = vmatprep.subr.mxu0 0.0
    %85 = vmatpush1.msra.mxu0 0.0
    %86 = vmatprep.subr.mxu0 0.0
    %87 = vmatpush1.msra.mxu0 0.0
    %88 = vmatprep.subr.mxu0 0.0
    %89 = vmatpush1.msra.mxu0 0.0
    %90 = vmatprep.subr.mxu0 0.0
    %91 = vmatpush1.msra.mxu0 0.0
    %92 = vmatprep.subr.mxu0 0.0
    %93 = vmatpush1.msra.mxu0 0.0
    %94 = vmatprep.subr.mxu0 0.0
    %95 = vmatpush1.msra.mxu0 0.0
    %96 = vmatprep.subr.mxu0 0.0
    %97 = vmatpush1.msra.mxu0 0.0
    %98 = vmatprep.mubr.f32.mxu0 0.0
    %99 = vmatmul.mubr.f32.gmra.mrb[0].mxu0 %v23
    %v100 = vpop.f32.mrb[0].mxu0
    %v101 = vadd.f32 0.0, %v100
    %v102 = vpop.f32.mrb[0].mxu0
    %103 = vmatprep.mubr.f32.mxu0 0.0
    %104 = vmatmul.mubr.f32.gmra.mrb[0].mxu0 %v26
    %v105 = vpop.f32.mrb[0].mxu0
    %v106 = vadd.f32 0.0, %v105
    %v107 = vpop.f32.mrb[0].mxu0
    %108 = vmatprep.mubr.f32.mxu0 0.0
    %109 = vmatmul.mubr.f32.gmra.mrb[0].mxu0 %v29
    %v110 = vpop.f32.mrb[0].mxu0
    %v111 = vadd.f32 0.0, %v110
    %v112 = vpop.f32.mrb[0].mxu0
    %113 = vmatprep.mubr.f32.mxu0 0.0
    %114 = vmatmul.mubr.f32.gmra.mrb[0].mxu0 %v32
    %v115 = vpop.f32.mrb[0].mxu0
    %v116 = vadd.f32 0.0, %v115
    %v117 = vpop.f32.mrb[0].mxu0
    %118 = vdwg.mxu0
    %v119 = vld [vmem:[%s2] sm:$0xff]
    %v120 = vld [vmem:[%s2 + $0x8] sm:$0xff]
    %v121 = vadd.f32 %v101, %v119
    %v122 = vadd.f32 %v106, %v120
    %v123 = vadd.f32 %v111, %v119
    %v124 = vadd.f32 %v116, %v120
    %v125 = vlaneseq
    %v126 = vand.u32 %v125, 127
    %vm127 = vcmp.lt.s32.totalorder %v126, 7
    %v128 = vand.u32 2147483647, %v121
    %vm129 = vcmp.le.f32.partialorder %v128, 0.7853982
    %vm130 = vcmp.lt.s32.totalorder %v121, 0
    %v131 = vand.u32 %v121, 2139095040
    %v132 = vshrl.u32 %v131, 23
    %v133 = vsub.s32 %v132, 127
    %v134 = vand.u32 2147483647, %v121
    %v135 = vand.u32 %v134, 8388607
    %v136 = vor.u32 %v135, 8388608
    %v137 = vsub.s32 0, %v136
    %v138 = vadd.s32 %v133, 1
    %vm139 = vcmp.gt.s32.totalorder %v138, 0
    %v140 = vsel %vm139, %v138, 0
    %v141 = vshrl.u32 %v140, 5
    %v142 = vand.u32 %v140, 31
    %v143 = vsub.s32 32, %v142
    %v144 = vshrl.u32 683565275, %v143
    %v145 = vshll.u32 683565275, %v142
    %v146 = vshrl.u32 2475754826, %v143
    %v147 = vor.u32 %v145, %v146
    %v148 = vshll.u32 2475754826, %v142
    %v149 = vshrl.u32 2131351028, %v143
    %v150 = vor.u32 %v148, %v149
    %v151 = vshll.u32 2131351028, %v142
    %v152 = vshrl.u32 2102212464, %v143
    %v153 = vor.u32 %v151, %v152
    %v154 = vshll.u32 2102212464, %v142
    %v155 = vshrl.u32 920167782, %v143
    %v156 = vor.u32 %v154, %v155
    %v157 = vshll.u32 920167782, %v142
    %v158 = vshrl.u32 1326507024, %v143
    %v159 = vor.u32 %v157, %v158
    %vm160 = vcmp.lt.s32.totalorder %v141, 1
    %vm161 = vcmp.lt.s32.totalorder %v141, 2
    %vm162 = vcmp.lt.s32.totalorder %v141, 3
    %vm163 = vcmp.lt.s32.totalorder %v141, 4
    %v164 = vsel %vm160, %v144, %v147
    %v165 = vsel %vm163, %v153, 2102212464
    %v166 = vsel %vm162, %v150, %v165
    %v167 = vsel %vm161, %v164, %v166
    %v168 = vsel %vm160, %v147, %v150
    %v169 = vsel %vm163, %v156, 920167782
    %v170 = vsel %vm162, %v153, %v169
    %v171 = vsel %vm161, %v168, %v170
    %v172 = vsel %vm160, %v150, %v153
    %v173 = vsel %vm163, %v159, 1326507024
    %v174 = vsel %vm162, %v156, %v173
    %v175 = vsel %vm161, %v172, %v174
    %v176 = vshll.u32 %v136, 8
    %v177 = vmul.u32.u64.compose %v176, %v175
    %v178 = vextract.low.u32 %v177
    %v179 = vextract.high.u32 %v177
    %v180 = vmul.u32.u64.compose %v176, %v171
    %v181 = vextract.low.u32 %v180
    %v182 = vextract.high.u32 %v180
    %v183 = vmul.u32 %v176, %v167
    %v184 = vadd.s32 %v179, %v181
    %vm185 = vc.u32 %v179, %v181
    %v186 = vadd.s32 %v182, 1
    %v187 = vsel %vm185, %v186, %v182
    %v188 = vadd.s32 %v183, %v187
    %v189 = vadd.s32 %v188, 536870912
    %v190 = vshrl.u32 %v189, 30
    %v191 = vshll.u32 %v190, 30
    %v192 = vsub.s32 %v188, %v191
    %vm193 = vcmp.lt.s32.totalorder %v192, 0
    %v194 = vsub.s32 0, %v192
    %v195 = vsel %vm193, %v194, %v192
    %v196 = vclz %v195
    %v197 = vsub.s32 %v196, 2
    %vm198 = vcmp.gt.s32.totalorder 0, %v197
    %v199 = vsel %vm198, 0, %v197
    %v200 = vsub.s32 32, %v199
    %v201 = vshll.u32 %v192, %v199
    %v202 = vshrl.u32 %v184, %v200
    %v203 = vor.u32 %v201, %v202
    %v204 = vsub.s32 4294967266, %v199
    %v205 = vadd.s32 %v204, 127
    %v206 = vshll.u32 %v205, 23
    %v207 = vor.u32 4788187, %v206
    %v208 = vand.u32 2147483647, %v207
    %v210 = vcvt.s32.f32 %v203
    %v211 = vmul.f32 %v210, %v208
    %v212 = vxor.u32 %v211, 2147483648
    %v213 = vsel %vm130, %v212, %v211
    %v214 = vsub.s32 4, %v190
    %v215 = vsel %vm130, %v214, %v190
    %v216 = vsel %vm129, %v121, %v213
    %v217 = vsel %vm129, 0, %v215
    %v218 = vcosq.f32.pop %v216
    %v219 = vsinq.f32.pop %v216
    %vm220 = vweird.f32 %v121
    %v221 = vadd.s32 %v217, 3
    %v222 = vand.u32 %v221, 3
    %vm223 = vcmp.lt.s32.totalorder %v222, 2
    %vm224 = vcmp.eq.s32.totalorder %v222, 0
    %v225 = vxor.u32 %v219, 2147483648
    %v226 = vsel %vm224, %v218, %v225
    %vm227 = vcmp.eq.s32.totalorder %v222, 2
    %v228 = vxor.u32 %v218, 2147483648
    %v229 = vsel %vm227, %v228, %v219
    %v230 = vsel %vm223, %v226, %v229
    %v231 = vsel %vm220, nan, %v230
    %v232 = vand.u32 2147483647, %v122
    %vm233 = vcmp.le.f32.partialorder %v232, 0.7853982
    %vm234 = vcmp.lt.s32.totalorder %v122, 0
    %v235 = vand.u32 %v122, 2139095040
    %v236 = vshrl.u32 %v235, 23
    %v237 = vsub.s32 %v236, 127
    %v238 = vand.u32 2147483647, %v122
    %v239 = vand.u32 %v238, 8388607
    %v240 = vor.u32 %v239, 8388608
    %v241 = vsub.s32 0, %v240
    %v242 = vadd.s32 %v237, 1
    %vm243 = vcmp.gt.s32.totalorder %v242, 0
    %v244 = vsel %vm243, %v242, 0
    %v245 = vshrl.u32 %v244, 5
    %v246 = vand.u32 %v244, 31
    %v247 = vsub.s32 32, %v246
    %v248 = vshrl.u32 683565275, %v247
    %v249 = vshll.u32 683565275, %v246
    %v250 = vshrl.u32 2475754826, %v247
    %v251 = vor.u32 %v249, %v250
    %v252 = vshll.u32 2475754826, %v246
    %v253 = vshrl.u32 2131351028, %v247
    %v254 = vor.u32 %v252, %v253
    %v255 = vshll.u32 2131351028, %v246
    %v256 = vshrl.u32 2102212464, %v247
    %v257 = vor.u32 %v255, %v256
    %v258 = vshll.u32 2102212464, %v246
    %v259 = vshrl.u32 920167782, %v247
    %v260 = vor.u32 %v258, %v259
    %v261 = vshll.u32 920167782, %v246
    %v262 = vshrl.u32 1326507024, %v247
    %v263 = vor.u32 %v261, %v262
    %vm264 = vcmp.lt.s32.totalorder %v245, 1
    %vm265 = vcmp.lt.s32.totalorder %v245, 2
    %vm266 = vcmp.lt.s32.totalorder %v245, 3
    %vm267 = vcmp.lt.s32.totalorder %v245, 4
    %v268 = vsel %vm264, %v248, %v251
    %v269 = vsel %vm267, %v257, 2102212464
    %v270 = vsel %vm266, %v254, %v269
    %v271 = vsel %vm265, %v268, %v270
    %v272 = vsel %vm264, %v251, %v254
    %v273 = vsel %vm267, %v260, 920167782
    %v274 = vsel %vm266, %v257, %v273
    %v275 = vsel %vm265, %v272, %v274
    %v276 = vsel %vm264, %v254, %v257
    %v277 = vsel %vm267, %v263, 1326507024
    %v278 = vsel %vm266, %v260, %v277
    %v279 = vsel %vm265, %v276, %v278
    %v280 = vshll.u32 %v240, 8
    %v281 = vmul.u32.u64.compose %v280, %v279
    %v282 = vextract.low.u32 %v281
    %v283 = vextract.high.u32 %v281
    %v284 = vmul.u32.u64.compose %v280, %v275
    %v285 = vextract.low.u32 %v284
    %v286 = vextract.high.u32 %v284
    %v287 = vmul.u32 %v280, %v271
    %v288 = vadd.s32 %v283, %v285
    %vm289 = vc.u32 %v283, %v285
    %v290 = vadd.s32 %v286, 1
    %v291 = vsel %vm289, %v290, %v286
    %v292 = vadd.s32 %v287, %v291
    %v293 = vadd.s32 %v292, 536870912
    %v294 = vshrl.u32 %v293, 30
    %v295 = vshll.u32 %v294, 30
    %v296 = vsub.s32 %v292, %v295
    %vm297 = vcmp.lt.s32.totalorder %v296, 0
    %v298 = vsub.s32 0, %v296
    %v299 = vsel %vm297, %v298, %v296
    %v300 = vclz %v299
    %v301 = vsub.s32 %v300, 2
    %vm302 = vcmp.gt.s32.totalorder 0, %v301
    %v303 = vsel %vm302, 0, %v301
    %v304 = vsub.s32 32, %v303
    %v305 = vshll.u32 %v296, %v303
    %v306 = vshrl.u32 %v288, %v304
    %v307 = vor.u32 %v305, %v306
    %v308 = vsub.s32 4294967266, %v303
    %v309 = vadd.s32 %v308, 127
    %v310 = vshll.u32 %v309, 23
    %v311 = vor.u32 4788187, %v310
    %v312 = vand.u32 2147483647, %v311
    %v314 = vcvt.s32.f32 %v307
    %v315 = vmul.f32 %v314, %v312
    %v316 = vxor.u32 %v315, 2147483648
    %v317 = vsel %vm234, %v316, %v315
    %v318 = vsub.s32 4, %v294
    %v319 = vsel %vm234, %v318, %v294
    %v320 = vsel %vm233, %v122, %v317
    %v321 = vsel %vm233, 0, %v319
    %v322 = vcosq.f32.pop %v320
    %v323 = vsinq.f32.pop %v320
    %vm324 = vweird.f32 %v122
    %v325 = vadd.s32 %v321, 3
    %v326 = vand.u32 %v325, 3
    %vm327 = vcmp.lt.s32.totalorder %v326, 2
    %vm328 = vcmp.eq.s32.totalorder %v326, 0
    %v329 = vxor.u32 %v323, 2147483648
    %v330 = vsel %vm328, %v322, %v329
    %vm331 = vcmp.eq.s32.totalorder %v326, 2
    %v332 = vxor.u32 %v322, 2147483648
    %v333 = vsel %vm331, %v332, %v323
    %v334 = vsel %vm327, %v330, %v333
    %v335 = vsel %vm324, nan, %v334
    %v336 = vand.u32 2147483647, %v123
    %vm337 = vcmp.le.f32.partialorder %v336, 0.7853982
    %vm338 = vcmp.lt.s32.totalorder %v123, 0
    %v339 = vand.u32 %v123, 2139095040
    %v340 = vshrl.u32 %v339, 23
    %v341 = vsub.s32 %v340, 127
    %v342 = vand.u32 2147483647, %v123
    %v343 = vand.u32 %v342, 8388607
    %v344 = vor.u32 %v343, 8388608
    %v345 = vsub.s32 0, %v344
    %v346 = vadd.s32 %v341, 1
    %vm347 = vcmp.gt.s32.totalorder %v346, 0
    %v348 = vsel %vm347, %v346, 0
    %v349 = vshrl.u32 %v348, 5
    %v350 = vand.u32 %v348, 31
    %v351 = vsub.s32 32, %v350
    %v352 = vshrl.u32 683565275, %v351
    %v353 = vshll.u32 683565275, %v350
    %v354 = vshrl.u32 2475754826, %v351
    %v355 = vor.u32 %v353, %v354
    %v356 = vshll.u32 2475754826, %v350
    %v357 = vshrl.u32 2131351028, %v351
    %v358 = vor.u32 %v356, %v357
    %v359 = vshll.u32 2131351028, %v350
    %v360 = vshrl.u32 2102212464, %v351
    %v361 = vor.u32 %v359, %v360
    %v362 = vshll.u32 2102212464, %v350
    %v363 = vshrl.u32 920167782, %v351
    %v364 = vor.u32 %v362, %v363
    %v365 = vshll.u32 920167782, %v350
    %v366 = vshrl.u32 1326507024, %v351
    %v367 = vor.u32 %v365, %v366
    %vm368 = vcmp.lt.s32.totalorder %v349, 1
    %vm369 = vcmp.lt.s32.totalorder %v349, 2
    %vm370 = vcmp.lt.s32.totalorder %v349, 3
    %vm371 = vcmp.lt.s32.totalorder %v349, 4
    %v372 = vsel %vm368, %v352, %v355
    %v373 = vsel %vm371, %v361, 2102212464
    %v374 = vsel %vm370, %v358, %v373
    %v375 = vsel %vm369, %v372, %v374
    %v376 = vsel %vm368, %v355, %v358
    %v377 = vsel %vm371, %v364, 920167782
    %v378 = vsel %vm370, %v361, %v377
    %v379 = vsel %vm369, %v376, %v378
    %v380 = vsel %vm368, %v358, %v361
    %v381 = vsel %vm371, %v367, 1326507024
    %v382 = vsel %vm370, %v364, %v381
    %v383 = vsel %vm369, %v380, %v382
    %v384 = vshll.u32 %v344, 8
    %v385 = vmul.u32.u64.compose %v384, %v383
    %v386 = vextract.low.u32 %v385
    %v387 = vextract.high.u32 %v385
    %v388 = vmul.u32.u64.compose %v384, %v379
    %v389 = vextract.low.u32 %v388
    %v390 = vextract.high.u32 %v388
    %v391 = vmul.u32 %v384, %v375
    %v392 = vadd.s32 %v387, %v389
    %vm393 = vc.u32 %v387, %v389
    %v394 = vadd.s32 %v390, 1
    %v395 = vsel %vm393, %v394, %v390
    %v396 = vadd.s32 %v391, %v395
    %v397 = vadd.s32 %v396, 536870912
    %v398 = vshrl.u32 %v397, 30
    %v399 = vshll.u32 %v398, 30
    %v400 = vsub.s32 %v396, %v399
    %vm401 = vcmp.lt.s32.totalorder %v400, 0
    %v402 = vsub.s32 0, %v400
    %v403 = vsel %vm401, %v402, %v400
    %v404 = vclz %v403
    %v405 = vsub.s32 %v404, 2
    %vm406 = vcmp.gt.s32.totalorder 0, %v405
    %v407 = vsel %vm406, 0, %v405
    %v408 = vsub.s32 32, %v407
    %v409 = vshll.u32 %v400, %v407
    %v410 = vshrl.u32 %v392, %v408
    %v411 = vor.u32 %v409, %v410
    %v412 = vsub.s32 4294967266, %v407
    %v413 = vadd.s32 %v412, 127
    %v414 = vshll.u32 %v413, 23
    %v415 = vor.u32 4788187, %v414
    %v416 = vand.u32 2147483647, %v415
    %v418 = vcvt.s32.f32 %v411
    %v419 = vmul.f32 %v418, %v416
    %v420 = vxor.u32 %v419, 2147483648
    %v421 = vsel %vm338, %v420, %v419
    %v422 = vsub.s32 4, %v398
    %v423 = vsel %vm338, %v422, %v398
    %v424 = vsel %vm337, %v123, %v421
    %v425 = vsel %vm337, 0, %v423
    %v426 = vcosq.f32.pop %v424
    %v427 = vsinq.f32.pop %v424
    %vm428 = vweird.f32 %v123
    %v429 = vadd.s32 %v425, 3
    %v430 = vand.u32 %v429, 3
    %vm431 = vcmp.lt.s32.totalorder %v430, 2
    %vm432 = vcmp.eq.s32.totalorder %v430, 0
    %v433 = vxor.u32 %v427, 2147483648
    %v434 = vsel %vm432, %v426, %v433
    %vm435 = vcmp.eq.s32.totalorder %v430, 2
    %v436 = vxor.u32 %v426, 2147483648
    %v437 = vsel %vm435, %v436, %v427
    %v438 = vsel %vm431, %v434, %v437
    %v439 = vsel %vm428, nan, %v438
    %v440 = vand.u32 2147483647, %v124
    %vm441 = vcmp.le.f32.partialorder %v440, 0.7853982
    %vm442 = vcmp.lt.s32.totalorder %v124, 0
    %v443 = vand.u32 %v124, 2139095040
    %v444 = vshrl.u32 %v443, 23
    %v445 = vsub.s32 %v444, 127
    %v446 = vand.u32 2147483647, %v124
    %v447 = vand.u32 %v446, 8388607
    %v448 = vor.u32 %v447, 8388608
    %v449 = vsub.s32 0, %v448
    %v450 = vadd.s32 %v445, 1
    %vm451 = vcmp.gt.s32.totalorder %v450, 0
    %v452 = vsel %vm451, %v450, 0
    %v453 = vshrl.u32 %v452, 5
    %v454 = vand.u32 %v452, 31
    %v455 = vsub.s32 32, %v454
    %v456 = vshrl.u32 683565275, %v455
    %v457 = vshll.u32 683565275, %v454
    %v458 = vshrl.u32 2475754826, %v455
    %v459 = vor.u32 %v457, %v458
    %v460 = vshll.u32 2475754826, %v454
    %v461 = vshrl.u32 2131351028, %v455
    %v462 = vor.u32 %v460, %v461
    %v463 = vshll.u32 2131351028, %v454
    %v464 = vshrl.u32 2102212464, %v455
    %v465 = vor.u32 %v463, %v464
    %v466 = vshll.u32 2102212464, %v454
    %v467 = vshrl.u32 920167782, %v455
    %v468 = vor.u32 %v466, %v467
    %v469 = vshll.u32 920167782, %v454
    %v470 = vshrl.u32 1326507024, %v455
    %v471 = vor.u32 %v469, %v470
    %vm472 = vcmp.lt.s32.totalorder %v453, 1
    %vm473 = vcmp.lt.s32.totalorder %v453, 2
    %vm474 = vcmp.lt.s32.totalorder %v453, 3
    %vm475 = vcmp.lt.s32.totalorder %v453, 4
    %v476 = vsel %vm472, %v456, %v459
    %v477 = vsel %vm475, %v465, 2102212464
    %v478 = vsel %vm474, %v462, %v477
    %v479 = vsel %vm473, %v476, %v478
    %v480 = vsel %vm472, %v459, %v462
    %v481 = vsel %vm475, %v468, 920167782
    %v482 = vsel %vm474, %v465, %v481
    %v483 = vsel %vm473, %v480, %v482
    %v484 = vsel %vm472, %v462, %v465
    %v485 = vsel %vm475, %v471, 1326507024
    %v486 = vsel %vm474, %v468, %v485
    %v487 = vsel %vm473, %v484, %v486
    %v488 = vshll.u32 %v448, 8
    %v489 = vmul.u32.u64.compose %v488, %v487
    %v490 = vextract.low.u32 %v489
    %v491 = vextract.high.u32 %v489
    %v492 = vmul.u32.u64.compose %v488, %v483
    %v493 = vextract.low.u32 %v492
    %v494 = vextract.high.u32 %v492
    %v495 = vmul.u32 %v488, %v479
    %v496 = vadd.s32 %v491, %v493
    %vm497 = vc.u32 %v491, %v493
    %v498 = vadd.s32 %v494, 1
    %v499 = vsel %vm497, %v498, %v494
    %v500 = vadd.s32 %v495, %v499
    %v501 = vadd.s32 %v500, 536870912
    %v502 = vshrl.u32 %v501, 30
    %v503 = vshll.u32 %v502, 30
    %v504 = vsub.s32 %v500, %v503
    %vm505 = vcmp.lt.s32.totalorder %v504, 0
    %v506 = vsub.s32 0, %v504
    %v507 = vsel %vm505, %v506, %v504
    %v508 = vclz %v507
    %v509 = vsub.s32 %v508, 2
    %vm510 = vcmp.gt.s32.totalorder 0, %v509
    %v511 = vsel %vm510, 0, %v509
    %v512 = vsub.s32 32, %v511
    %v513 = vshll.u32 %v504, %v511
    %v514 = vshrl.u32 %v496, %v512
    %v515 = vor.u32 %v513, %v514
    %v516 = vsub.s32 4294967266, %v511
    %v517 = vadd.s32 %v516, 127
    %v518 = vshll.u32 %v517, 23
    %v519 = vor.u32 4788187, %v518
    %v520 = vand.u32 2147483647, %v519
    %v522 = vcvt.s32.f32 %v515
    %v523 = vmul.f32 %v522, %v520
    %v524 = vxor.u32 %v523, 2147483648
    %v525 = vsel %vm442, %v524, %v523
    %v526 = vsub.s32 4, %v502
    %v527 = vsel %vm442, %v526, %v502
    %v528 = vsel %vm441, %v124, %v525
    %v529 = vsel %vm441, 0, %v527
    %v530 = vcosq.f32.pop %v528
    %v531 = vsinq.f32.pop %v528
    %vm532 = vweird.f32 %v124
    %v533 = vadd.s32 %v529, 3
    %v534 = vand.u32 %v533, 3
    %vm535 = vcmp.lt.s32.totalorder %v534, 2
    %vm536 = vcmp.eq.s32.totalorder %v534, 0
    %v537 = vxor.u32 %v531, 2147483648
    %v538 = vsel %vm536, %v530, %v537
    %vm539 = vcmp.eq.s32.totalorder %v534, 2
    %v540 = vxor.u32 %v530, 2147483648
    %v541 = vsel %vm539, %v540, %v531
    %v542 = vsel %vm535, %v538, %v541
    %v543 = vsel %vm532, nan, %v542
    %v544 = vsel %vm127, %v231, %v121
    %v545 = vsel %vm127, %v335, %v122
    %v546 = vsel %vm127, %v439, %v123
    %v547 = vsel %vm127, %v543, %v124
    %v548 = vcombine.high %v544, 0.0
    %v550 = vunpack.c.l.s4 1983009808
    %v551 = vunpack.c.0.s8 %v550
    %v552 = vlaneseq
    %v553 = vshrl.u32 %v552, 7
    %v554 = vsub.s32 %v551, %v553
    %v555 = vrot.slane %v544, %v554
    %v557 = vunpack.c.l.s4 1983009808
    %v558 = vunpack.c.0.s8 %v557
    %v559 = vlaneseq
    %v560 = vshrl.u32 %v559, 7
    %v561 = vsub.s32 %v558, %v560
    %v562 = vrot.slane %v548, %v561
    %v563 = vcombine.high %v546, 0.0
    %v565 = vunpack.c.l.s4 1983009808
    %v566 = vunpack.c.0.s8 %v565
    %v567 = vlaneseq
    %v568 = vshrl.u32 %v567, 7
    %v569 = vsub.s32 %v566, %v568
    %v570 = vrot.slane %v546, %v569
    %v572 = vunpack.c.l.s4 1983009808
    %v573 = vunpack.c.0.s8 %v572
    %v574 = vlaneseq
    %v575 = vshrl.u32 %v574, 7
    %v576 = vsub.s32 %v573, %v575
    %v577 = vrot.slane %v563, %v576
    %v578 = vcombine.low %v555, %v570
    %v579 = vcombine.high %v555, %v570
    %v581 = vunpack.c.l.s4 1934713408
    %v582 = vunpack.c.0.s8 %v581
    %v583 = vlaneseq
    %v584 = vshrl.u32 %v583, 7
    %v585 = vsub.s32 %v582, %v584
    %v586 = vrot.slane %v578, %v585
    %v588 = vunpack.c.l.s4 1934713408
    %v589 = vunpack.c.0.s8 %v588
    %v590 = vlaneseq
    %v591 = vshrl.u32 %v590, 7
    %v592 = vsub.s32 %v589, %v591
    %v593 = vrot.slane %v579, %v592
    %v594 = vcombine.low %v562, %v577
    %v595 = vcombine.high %v562, %v577
    %v597 = vunpack.c.l.s4 1934713408
    %v598 = vunpack.c.0.s8 %v597
    %v599 = vlaneseq
    %v600 = vshrl.u32 %v599, 7
    %v601 = vsub.s32 %v598, %v600
    %v602 = vrot.slane %v594, %v601
    %v604 = vunpack.c.l.s4 1934713408
    %v605 = vunpack.c.0.s8 %v604
    %v606 = vlaneseq
    %v607 = vshrl.u32 %v606, 7
    %v608 = vsub.s32 %v605, %v607
    %v609 = vrot.slane %v595, %v608
    %v610 = vcombine.high %v586, 0.0
    %v611 = vcombine.high %v593, 0.0
    %v612 = vcombine.high %v602, 0.0
    %v613 = vcombine.high %v609, 0.0
    %v614 = vcombine.high %v545, 0.0
    %v616 = vunpack.c.l.s4 1983009808
    %v617 = vunpack.c.0.s8 %v616
    %v618 = vlaneseq
    %v619 = vshrl.u32 %v618, 7
    %v620 = vsub.s32 %v617, %v619
    %v621 = vrot.slane %v545, %v620
    %v623 = vunpack.c.l.s4 1983009808
    %v624 = vunpack.c.0.s8 %v623
    %v625 = vlaneseq
    %v626 = vshrl.u32 %v625, 7
    %v627 = vsub.s32 %v624, %v626
    %v628 = vrot.slane %v614, %v627
    %v629 = vcombine.high %v547, 0.0
    %v631 = vunpack.c.l.s4 1983009808
    %v632 = vunpack.c.0.s8 %v631
    %v633 = vlaneseq
    %v634 = vshrl.u32 %v633, 7
    %v635 = vsub.s32 %v632, %v634
    %v636 = vrot.slane %v547, %v635
    %v638 = vunpack.c.l.s4 1983009808
    %v639 = vunpack.c.0.s8 %v638
    %v640 = vlaneseq
    %v641 = vshrl.u32 %v640, 7
    %v642 = vsub.s32 %v639, %v641
    %v643 = vrot.slane %v629, %v642
    %v644 = vcombine.low %v621, %v636
    %v645 = vcombine.high %v621, %v636
    %v647 = vunpack.c.l.s4 1934713408
    %v648 = vunpack.c.0.s8 %v647
    %v649 = vlaneseq
    %v650 = vshrl.u32 %v649, 7
    %v651 = vsub.s32 %v648, %v650
    %v652 = vrot.slane %v644, %v651
    %v654 = vunpack.c.l.s4 1934713408
    %v655 = vunpack.c.0.s8 %v654
    %v656 = vlaneseq
    %v657 = vshrl.u32 %v656, 7
    %v658 = vsub.s32 %v655, %v657
    %v659 = vrot.slane %v645, %v658
    %v660 = vcombine.low %v628, %v643
    %v661 = vcombine.high %v628, %v643
    %v663 = vunpack.c.l.s4 1934713408
    %v664 = vunpack.c.0.s8 %v663
    %v665 = vlaneseq
    %v666 = vshrl.u32 %v665, 7
    %v667 = vsub.s32 %v664, %v666
    %v668 = vrot.slane %v660, %v667
    %v670 = vunpack.c.l.s4 1934713408
    %v671 = vunpack.c.0.s8 %v670
    %v672 = vlaneseq
    %v673 = vshrl.u32 %v672, 7
    %v674 = vsub.s32 %v671, %v673
    %v675 = vrot.slane %v661, %v674
    %v676 = vcombine.high %v652, 0.0
    %v677 = vcombine.high %v659, 0.0
    %v678 = vcombine.high %v668, 0.0
    %v679 = vcombine.high %v675, 0.0
    %681 = vrot.lane.b32.xlu0 %v610, 8
    %v682 = vpop.permute.xlu0 %681
    %685 = vrot.lane.b32.xlu0 %v593, 16
    %v686 = vpop.permute.xlu0 %685
    %689 = vrot.lane.b32.xlu0 %v611, 24
    %v690 = vpop.permute.xlu0 %689
    %693 = vrot.lane.b32.xlu0 %v602, 32
    %v694 = vpop.permute.xlu0 %693
    %697 = vrot.lane.b32.xlu0 %v612, 40
    %v698 = vpop.permute.xlu0 %697
    %701 = vrot.lane.b32.xlu0 %v609, 48
    %v702 = vpop.permute.xlu0 %701
    %705 = vrot.lane.b32.xlu0 %v613, 56
    %v706 = vpop.permute.xlu0 %705
    %709 = vrot.lane.b32.xlu0 %v652, 64
    %v710 = vpop.permute.xlu0 %709
    %713 = vrot.lane.b32.xlu0 %v676, 72
    %v714 = vpop.permute.xlu0 %713
    %717 = vrot.lane.b32.xlu0 %v659, 80
    %v718 = vpop.permute.xlu0 %717
    %721 = vrot.lane.b32.xlu0 %v677, 88
    %v722 = vpop.permute.xlu0 %721
    %725 = vrot.lane.b32.xlu0 %v668, 96
    %v726 = vpop.permute.xlu0 %725
    %729 = vrot.lane.b32.xlu0 %v678, 104
    %v730 = vpop.permute.xlu0 %729
    %733 = vrot.lane.b32.xlu0 %v675, 112
    %v734 = vpop.permute.xlu0 %733
    %737 = vrot.lane.b32.xlu0 %v679, 120
    %v738 = vpop.permute.xlu0 %737
    %vm740 = vcmask 64512
    %v741 = vsel %vm740, %v586, %v682
    %v742 = vsel %vm21, %v741, %v686
    %vm743 = vcmask 195584
    %v744 = vsel %vm743, %v742, %v690
    %vm745 = vcmask 261120
    %v746 = vsel %vm745, %v744, %v694
    %vm747 = vcmask 326656
    %v748 = vsel %vm747, %v746, %v698
    %vm749 = vcmask 392192
    %v750 = vsel %vm749, %v748, %v702
    %vm751 = vcmask 457728
    %v752 = vsel %vm751, %v750, %v706
    %vm753 = vcmask 523264
    %v754 = vsel %vm753, %v752, %v710
    %vm755 = vcmask 588800
    %v756 = vsel %vm755, %v754, %v714
    %vm757 = vcmask 654336
    %v758 = vsel %vm757, %v756, %v718
    %vm759 = vcmask 719872
    %v760 = vsel %vm759, %v758, %v722
    %vm761 = vcmask 785408
    %v762 = vsel %vm761, %v760, %v726
    %vm763 = vcmask 850944
    %v764 = vsel %vm763, %v762, %v730
    %vm765 = vcmask 916480
    %v766 = vsel %vm765, %v764, %v734
    %vm767 = vcmask 982016
    %v768 = vsel %vm767, %v766, %v738
    %769 = vst [vmem:[#allocation2] sm:$0x3] %v768
    // Predicated region
    $region14: #{tpu_custom_call.1} parent=1 // pred_check
      _
    $region15: #{tpu_custom_call.1} parent=1 // pred_check_branch
      %771 = sbr.rel (0) target = $region17
    $region16: #{tpu_custom_call.1} parent=1 // pred_region
      %s773 = ssub.s32 32, 32
      %774 = vsyncadd [#allocation3], %s773
      %s776 = sshll.u32 [#allocation2], 4
      %s777 = int_to_ptr.vmem [resolvable:$true] %s776
      %779 = dma.vmem_to_hbm [thread:$0]  %s777, 32, %s3, [#allocation3]
    $region17: #{tpu_custom_call.1} parent=1 // pred_fallthru
      _
    // Predicated region
    $region18: #{tpu_custom_call.1} parent=1 // pred_check
      _
    $region19: #{tpu_custom_call.1} parent=1 // pred_check_branch
      %781 = sbr.rel (0) target = $region21
    $region20: #{tpu_custom_call.1} parent=1 // pred_region
      %782 = dma.done [#allocation3], 32
    $region21: #{tpu_custom_call.1} parent=1 // pred_fallthru
      _
    %783 = vsyncpa [#allocation3], 1

</llo_original>
